<compile_context>
chip_gen: v7x
topology: tpu7x:2x2x1
jax: 0.10.0
libtpu: 0.0.40
codegen_flags: <defaults>
</compile_context>

<pallas_src>
import math

import jax
import jax.numpy as jnp
from jax.experimental import pallas as pl
from jax.experimental.pallas import tpu as pltpu


# -----------------------------------------------------------------------------
# Fused kernel: Q/K/V projections + scaled-dot-product cross attention
# -----------------------------------------------------------------------------
def _bidir_cross_attn_kernel(q_ref, k_ref, v_ref,
                             wq_ref, bq_ref, wk_ref, bk_ref, wv_ref, bv_ref,
                             o_ref):
    B, Sq, Dm = q_ref.shape
    _, Sk, _ = k_ref.shape
    Qd = wq_ref.shape[-1]
    Kd = wk_ref.shape[-1]
    Vd = wv_ref.shape[-1]

    # --- linear projections: single lane-dense 2-D matmuls (one MXU push each)
    q2 = q_ref[...].reshape(B * Sq, Dm)
    k2 = k_ref[...].reshape(B * Sk, Dm)
    v2 = v_ref[...].reshape(B * Sk, Dm)

    Q = (jnp.dot(q2, wq_ref[...], preferred_element_type=jnp.float32)
         + bq_ref[...]).reshape(B, Sq, Qd)
    K = (jnp.dot(k2, wk_ref[...], preferred_element_type=jnp.float32)
         + bk_ref[...]).reshape(B, Sk, Kd)
    V = (jnp.dot(v2, wv_ref[...], preferred_element_type=jnp.float32)
         + bv_ref[...]).reshape(B, Sk, Vd)

    # --- scaled dot-product attention (softmax over keys) ---------------------
    scale = 1.0 / math.sqrt(float(Kd))           # torch: score / K.shape[-1]**0.5
    s = jnp.einsum('bqe,bke->bqk', Q, K,
                   preferred_element_type=jnp.float32) * scale

    m = jnp.max(s, axis=-1, keepdims=True)       # numerically-stable softmax
    e = jnp.exp(s - m)
    denom = jnp.sum(e, axis=-1, keepdims=True)
    p = e * pl.reciprocal(denom)                 # exact reciprocal; mul on VPU

    out = jnp.einsum('bqk,bke->bqe', p, V, preferred_element_type=jnp.float32)
    o_ref[...] = out.astype(o_ref.dtype)


# -----------------------------------------------------------------------------
# Wrapper
# -----------------------------------------------------------------------------
def _full_spec(shape):
    n = len(shape)
    return pl.BlockSpec(shape, lambda i, n=n: (0,) * n)


def bidirectional_cross_attention(query, key, value, params):
    B, Sq, _ = query.shape
    Vd = params['wv'].shape[-1]
    args = (query, key, value,
            params['wq'], params['bq'],
            params['wk'], params['bk'],
            params['wv'], params['bv'])
    return pl.pallas_call(
        _bidir_cross_attn_kernel,
        out_shape=jax.ShapeDtypeStruct((B, Sq, Vd), query.dtype),
        grid=(1,),
        in_specs=[_full_spec(a.shape) for a in args],
        out_specs=_full_spec((B, Sq, Vd)),
        compiler_params=pltpu.CompilerParams(
            dimension_semantics=("arbitrary",)),
    )(*args)


# -----------------------------------------------------------------------------
# Pure-JAX reference (mirrors the PyTorch module)
# -----------------------------------------------------------------------------
def bidirectional_cross_attention_ref(query, key, value, params):
    Q = query @ params['wq'] + params['bq']
    K = key @ params['wk'] + params['bk']
    V = value @ params['wv'] + params['bv']
    s = jnp.einsum('bqe,bke->bqk', Q, K) / math.sqrt(K.shape[-1])
    p = jax.nn.softmax(s, axis=-1)
    return jnp.einsum('bqk,bke->bqe', p, V)


# -----------------------------------------------------------------------------
# Driver
# -----------------------------------------------------------------------------
if __name__ == "__main__":
    B, Sq, Skv = 2, 8, 16
    model_dim, Q_dim, K_dim, V_dim = 32, 32, 32, 32   # Q_dim == K_dim (required by QK^T)

    key0 = jax.random.PRNGKey(0)
    kq, kk, kv, kwq, kwk, kwv, kbq, kbk, kbv = jax.random.split(key0, 9)

    query = jax.random.normal(kq, (B, Sq, model_dim), jnp.float32)
    key_in = jax.random.normal(kk, (B, Skv, model_dim), jnp.float32)
    value_in = jax.random.normal(kv, (B, Skv, model_dim), jnp.float32)

    w_scale = 1.0 / math.sqrt(model_dim)
    params = {
        'wq': (w_scale * jax.random.normal(kwq, (model_dim, Q_dim))).astype(jnp.float32),
        'bq': (0.1 * jax.random.normal(kbq, (1, Q_dim))).astype(jnp.float32),
        'wk': (w_scale * jax.random.normal(kwk, (model_dim, K_dim))).astype(jnp.float32),
        'bk': (0.1 * jax.random.normal(kbk, (1, K_dim))).astype(jnp.float32),
        'wv': (w_scale * jax.random.normal(kwv, (model_dim, V_dim))).astype(jnp.float32),
        'bv': (0.1 * jax.random.normal(kbv, (1, V_dim))).astype(jnp.float32),
    }

    out = bidirectional_cross_attention(query, key_in, value_in, params)
    out = jax.block_until_ready(out)

    ref = bidirectional_cross_attention_ref(query, key_in, value_in, params)
    assert out.shape == (B, Sq, V_dim)
    assert jnp.allclose(out, ref, atol=1e-4, rtol=1e-4), (
        f"max abs diff {jnp.max(jnp.abs(out - ref))}")

    print("KERNEL_OK")
</pallas_src>

<mosaic_0001>
module attributes {stable_mosaic.version = 11 : i64} {
  func.func @_bidir_cross_attn_kernel(%arg0: i32, %arg1: memref<2x8x32xf32, #tpu.memory_space<vmem>>, %arg2: memref<2x16x32xf32, #tpu.memory_space<vmem>>, %arg3: memref<2x16x32xf32, #tpu.memory_space<vmem>>, %arg4: memref<32x32xf32, #tpu.memory_space<vmem>>, %arg5: memref<1x32xf32, #tpu.memory_space<vmem>>, %arg6: memref<32x32xf32, #tpu.memory_space<vmem>>, %arg7: memref<1x32xf32, #tpu.memory_space<vmem>>, %arg8: memref<32x32xf32, #tpu.memory_space<vmem>>, %arg9: memref<1x32xf32, #tpu.memory_space<vmem>>, %arg10: memref<2x8x32xf32, #tpu.memory_space<vmem>>) attributes {dimension_semantics = [#tpu.dimension_semantics<arbitrary>], iteration_bounds = array<i64: 1>, scalar_prefetch = 0 : i64, scratch_operands = 0 : i64, tpu.core_type = #tpu.core_type<tc>, window_params = [{pipeline_mode = #tpu.pipeline_mode<synchronous>, transform_indices = @transform_0, window_bounds = array<i64: 2, 8, 32>}, {pipeline_mode = #tpu.pipeline_mode<synchronous>, transform_indices = @transform_1, window_bounds = array<i64: 2, 16, 32>}, {pipeline_mode = #tpu.pipeline_mode<synchronous>, transform_indices = @transform_2, window_bounds = array<i64: 2, 16, 32>}, {pipeline_mode = #tpu.pipeline_mode<synchronous>, transform_indices = @transform_3, window_bounds = array<i64: 32, 32>}, {pipeline_mode = #tpu.pipeline_mode<synchronous>, transform_indices = @transform_4, window_bounds = array<i64: 1, 32>}, {pipeline_mode = #tpu.pipeline_mode<synchronous>, transform_indices = @transform_5, window_bounds = array<i64: 32, 32>}, {pipeline_mode = #tpu.pipeline_mode<synchronous>, transform_indices = @transform_6, window_bounds = array<i64: 1, 32>}, {pipeline_mode = #tpu.pipeline_mode<synchronous>, transform_indices = @transform_7, window_bounds = array<i64: 32, 32>}, {pipeline_mode = #tpu.pipeline_mode<synchronous>, transform_indices = @transform_8, window_bounds = array<i64: 1, 32>}, {pipeline_mode = #tpu.pipeline_mode<synchronous>, transform_indices = @transform_9, window_bounds = array<i64: 2, 8, 32>}]} {
    %c0 = arith.constant 0 : index
    %c0_0 = arith.constant 0 : index
    %c0_1 = arith.constant 0 : index
    %0 = vector.load %arg1[%c0, %c0_0, %c0_1] : memref<2x8x32xf32, #tpu.memory_space<vmem>>, vector<2x8x32xf32>
    %1 = vector.shape_cast %0 : vector<2x8x32xf32> to vector<16x32xf32>
    %c0_2 = arith.constant 0 : index
    %c0_3 = arith.constant 0 : index
    %c0_4 = arith.constant 0 : index
    %2 = vector.load %arg2[%c0_2, %c0_3, %c0_4] : memref<2x16x32xf32, #tpu.memory_space<vmem>>, vector<2x16x32xf32>
    %3 = vector.shape_cast %2 : vector<2x16x32xf32> to vector<32x32xf32>
    %c0_5 = arith.constant 0 : index
    %c0_6 = arith.constant 0 : index
    %c0_7 = arith.constant 0 : index
    %4 = vector.load %arg3[%c0_5, %c0_6, %c0_7] : memref<2x16x32xf32, #tpu.memory_space<vmem>>, vector<2x16x32xf32>
    %5 = vector.shape_cast %4 : vector<2x16x32xf32> to vector<32x32xf32>
    %c0_8 = arith.constant 0 : index
    %c0_9 = arith.constant 0 : index
    %6 = vector.load %arg4[%c0_8, %c0_9] : memref<32x32xf32, #tpu.memory_space<vmem>>, vector<32x32xf32>
    %cst = arith.constant dense<0.000000e+00> : vector<16x32xf32>
    %7 = tpu.matmul %1, %6, %cst {dimension_numbers = #tpu.dot_dimension_numbers<[1], [0], [0], [1], [0, 0, 1, 1], [], []>} : vector<16x32xf32>, vector<32x32xf32>, vector<16x32xf32> -> vector<16x32xf32>
    %c0_10 = arith.constant 0 : index
    %c0_11 = arith.constant 0 : index
    %8 = vector.load %arg5[%c0_10, %c0_11] : memref<1x32xf32, #tpu.memory_space<vmem>>, vector<1x32xf32>
    %9 = vector.broadcast %8 : vector<1x32xf32> to vector<16x32xf32>
    %10 = arith.addf %7, %9 : vector<16x32xf32>
    %11 = vector.shape_cast %10 : vector<16x32xf32> to vector<2x8x32xf32>
    %c0_12 = arith.constant 0 : index
    %c0_13 = arith.constant 0 : index
    %12 = vector.load %arg6[%c0_12, %c0_13] : memref<32x32xf32, #tpu.memory_space<vmem>>, vector<32x32xf32>
    %cst_14 = arith.constant dense<0.000000e+00> : vector<32x32xf32>
    %13 = tpu.matmul %3, %12, %cst_14 {dimension_numbers = #tpu.dot_dimension_numbers<[1], [0], [0], [1], [0, 0, 1, 1], [], []>} : vector<32x32xf32>, vector<32x32xf32>, vector<32x32xf32> -> vector<32x32xf32>
    %c0_15 = arith.constant 0 : index
    %c0_16 = arith.constant 0 : index
    %14 = vector.load %arg7[%c0_15, %c0_16] : memref<1x32xf32, #tpu.memory_space<vmem>>, vector<1x32xf32>
    %15 = vector.broadcast %14 : vector<1x32xf32> to vector<32x32xf32>
    %16 = arith.addf %13, %15 : vector<32x32xf32>
    %17 = vector.shape_cast %16 : vector<32x32xf32> to vector<2x16x32xf32>
    %c0_17 = arith.constant 0 : index
    %c0_18 = arith.constant 0 : index
    %18 = vector.load %arg8[%c0_17, %c0_18] : memref<32x32xf32, #tpu.memory_space<vmem>>, vector<32x32xf32>
    %cst_19 = arith.constant dense<0.000000e+00> : vector<32x32xf32>
    %19 = tpu.matmul %5, %18, %cst_19 {dimension_numbers = #tpu.dot_dimension_numbers<[1], [0], [0], [1], [0, 0, 1, 1], [], []>} : vector<32x32xf32>, vector<32x32xf32>, vector<32x32xf32> -> vector<32x32xf32>
    %c0_20 = arith.constant 0 : index
    %c0_21 = arith.constant 0 : index
    %20 = vector.load %arg9[%c0_20, %c0_21] : memref<1x32xf32, #tpu.memory_space<vmem>>, vector<1x32xf32>
    %21 = vector.broadcast %20 : vector<1x32xf32> to vector<32x32xf32>
    %22 = arith.addf %19, %21 : vector<32x32xf32>
    %23 = vector.shape_cast %22 : vector<32x32xf32> to vector<2x16x32xf32>
    "tpu.trace_start"() <{level = 10 : i32, message = "bqe,bke->bqk"}> : () -> ()
    %cst_22 = arith.constant dense<0.000000e+00> : vector<2x8x16xf32>
    %24 = tpu.matmul %11, %17, %cst_22 {dimension_numbers = #tpu.dot_dimension_numbers<[2], [2], [1], [1], [0, 0, 0, 1, 1, 1], [0], [0]>} : vector<2x8x32xf32>, vector<2x16x32xf32>, vector<2x8x16xf32> -> vector<2x8x16xf32>
    "tpu.trace_stop"() : () -> ()
    %cst_23 = arith.constant 0.176776692 : f32
    %25 = vector.broadcast %cst_23 : f32 to vector<2x8x16xf32>
    %26 = arith.mulf %24, %25 : vector<2x8x16xf32>
    %cst_24 = arith.constant dense<0xFF800000> : vector<2x8xf32>
    %27 = vector.multi_reduction <maximumf>, %26, %cst_24 [2] : vector<2x8x16xf32> to vector<2x8xf32>
    %28 = vector.shape_cast %27 : vector<2x8xf32> to vector<2x8x1xf32>
    %29 = vector.broadcast %28 : vector<2x8x1xf32> to vector<2x8x16xf32>
    %30 = arith.subf %26, %29 : vector<2x8x16xf32>
    %31 = math.exp %30 : vector<2x8x16xf32>
    %cst_25 = arith.constant dense<0.000000e+00> : vector<2x8xf32>
    %32 = vector.multi_reduction <add>, %31, %cst_25 [2] : vector<2x8x16xf32> to vector<2x8xf32>
    %33 = vector.shape_cast %32 : vector<2x8xf32> to vector<2x8x1xf32>
    %34 = tpu.reciprocal %33 : vector<2x8x1xf32> -> vector<2x8x1xf32>
    %35 = vector.broadcast %34 : vector<2x8x1xf32> to vector<2x8x16xf32>
    %36 = arith.mulf %31, %35 : vector<2x8x16xf32>
    "tpu.trace_start"() <{level = 10 : i32, message = "bqk,bke->bqe"}> : () -> ()
    %cst_26 = arith.constant dense<0.000000e+00> : vector<2x8x32xf32>
    %37 = tpu.matmul %36, %23, %cst_26 {dimension_numbers = #tpu.dot_dimension_numbers<[2], [1], [1], [2], [0, 0, 0, 1, 1, 2], [0], [0]>} : vector<2x8x16xf32>, vector<2x16x32xf32>, vector<2x8x32xf32> -> vector<2x8x32xf32>
    "tpu.trace_stop"() : () -> ()
    %c0_27 = arith.constant 0 : index
    %c0_28 = arith.constant 0 : index
    %c0_29 = arith.constant 0 : index
    %38 = vector.load %arg10[%c0_27, %c0_28, %c0_29] : memref<2x8x32xf32, #tpu.memory_space<vmem>>, vector<2x8x32xf32>
    tpu.vector_store %arg10[%c0_27, %c0_28, %c0_29], %37 {strides = array<i32>} : memref<2x8x32xf32, #tpu.memory_space<vmem>>, vector<2x8x32xf32>,
    return
  }
  func.func @transform_0(%arg0: i32) -> (i32, i32, i32) {
    %c0_i32 = arith.constant 0 : i32
    %c0_i32_0 = arith.constant 0 : i32
    %c0_i32_1 = arith.constant 0 : i32
    %c0_i32_2 = arith.constant 0 : i32
    return %c0_i32, %c0_i32_0, %c0_i32_1 : i32, i32, i32
  }
  func.func @transform_1(%arg0: i32) -> (i32, i32, i32) {
    %c0_i32 = arith.constant 0 : i32
    %c0_i32_0 = arith.constant 0 : i32
    %c0_i32_1 = arith.constant 0 : i32
    %c0_i32_2 = arith.constant 0 : i32
    return %c0_i32, %c0_i32_0, %c0_i32_1 : i32, i32, i32
  }
  func.func @transform_2(%arg0: i32) -> (i32, i32, i32) {
    %c0_i32 = arith.constant 0 : i32
    %c0_i32_0 = arith.constant 0 : i32
    %c0_i32_1 = arith.constant 0 : i32
    %c0_i32_2 = arith.constant 0 : i32
    return %c0_i32, %c0_i32_0, %c0_i32_1 : i32, i32, i32
  }
  func.func @transform_3(%arg0: i32) -> (i32, i32) {
    %c0_i32 = arith.constant 0 : i32
    %c0_i32_0 = arith.constant 0 : i32
    %c0_i32_1 = arith.constant 0 : i32
    return %c0_i32, %c0_i32_0 : i32, i32
  }
  func.func @transform_4(%arg0: i32) -> (i32, i32) {
    %c0_i32 = arith.constant 0 : i32
    %c0_i32_0 = arith.constant 0 : i32
    %c0_i32_1 = arith.constant 0 : i32
    return %c0_i32, %c0_i32_0 : i32, i32
  }
  func.func @transform_5(%arg0: i32) -> (i32, i32) {
    %c0_i32 = arith.constant 0 : i32
    %c0_i32_0 = arith.constant 0 : i32
    %c0_i32_1 = arith.constant 0 : i32
    return %c0_i32, %c0_i32_0 : i32, i32
  }
  func.func @transform_6(%arg0: i32) -> (i32, i32) {
    %c0_i32 = arith.constant 0 : i32
    %c0_i32_0 = arith.constant 0 : i32
    %c0_i32_1 = arith.constant 0 : i32
    return %c0_i32, %c0_i32_0 : i32, i32
  }
  func.func @transform_7(%arg0: i32) -> (i32, i32) {
    %c0_i32 = arith.constant 0 : i32
    %c0_i32_0 = arith.constant 0 : i32
    %c0_i32_1 = arith.constant 0 : i32
    return %c0_i32, %c0_i32_0 : i32, i32
  }
  func.func @transform_8(%arg0: i32) -> (i32, i32) {
    %c0_i32 = arith.constant 0 : i32
    %c0_i32_0 = arith.constant 0 : i32
    %c0_i32_1 = arith.constant 0 : i32
    return %c0_i32, %c0_i32_0 : i32, i32
  }
  func.func @transform_9(%arg0: i32) -> (i32, i32, i32) {
    %c0_i32 = arith.constant 0 : i32
    %c0_i32_0 = arith.constant 0 : i32
    %c0_i32_1 = arith.constant 0 : i32
    %c0_i32_2 = arith.constant 0 : i32
    return %c0_i32, %c0_i32_0, %c0_i32_1 : i32, i32, i32
  }
}

</mosaic_0001>

<llo_original>
// kernel: tpu_custom_call.1
$region0: #{tpu_custom_call.1}
  #allocation0 [shape = 'u32[]', space=smem, size = 0x4, offset = 0x4, fixed_abs, tag = 'smem constant byte address 0x4 - core index']
  #allocation1 [shape = 'u32[144,128]{1,0:T(1,128)}', space=vmem, size = 0x12000, scoped, tag = 'internal scratch']
  %s0 = inlined_call_operand.hbm [shape: f32[2,8,32], index: 0, kind: input, shape index: {}]
  %s1 = inlined_call_operand.hbm [shape: f32[2,16,32], index: 1, kind: input, shape index: {}]
  %s2 = inlined_call_operand.hbm [shape: f32[2,16,32], index: 2, kind: input, shape index: {}]
  %s3 = inlined_call_operand.hbm [shape: f32[32,32], index: 3, kind: input, shape index: {}]
  %s4 = inlined_call_operand.vmem [shape: f32[1,32], index: 4, kind: input, shape index: {}]
  %s5 = inlined_call_operand.hbm [shape: f32[32,32], index: 5, kind: input, shape index: {}]
  %s6 = inlined_call_operand.vmem [shape: f32[1,32], index: 6, kind: input, shape index: {}]
  %s7 = inlined_call_operand.hbm [shape: f32[32,32], index: 7, kind: input, shape index: {}]
  %s8 = inlined_call_operand.vmem [shape: f32[1,32], index: 8, kind: input, shape index: {}]
  %s9 = inlined_call_operand.hbm [shape: f32[2,8,32], index: 9, kind: output, shape index: {}]
  %s10 = sld [smem:[#allocation0]]
  $region70: #{tpu_custom_call.1} parent=0
    _
  %s12 = ssub.s32 1, %s10
  %s13 = scalar_select 0, %s12, %s10
  $region1: #{tpu_custom_call.1} parent=0
    #allocation2 [shape = 'u8[8192]{0}', space=vmem, size = 0x2000, scoped, tag = 'input window, operand 0, single buffered']
    #allocation3 [shape = 's32[1]{0}', space=sflag, size = 0x4, scoped, tag = 'scoped memory for tpu_custom_call.1']
    #allocation4 [shape = 's32[1]{0}', space=sflag, size = 0x4, scoped, tag = 'scoped memory for tpu_custom_call.1']
    #allocation5 [shape = 'u8[16384]{0}', space=vmem, size = 0x4000, scoped, tag = 'input window, operand 1, single buffered']
    #allocation6 [shape = 's32[1]{0}', space=sflag, size = 0x4, scoped, tag = 'scoped memory for tpu_custom_call.1']
    #allocation7 [shape = 'u8[16384]{0}', space=vmem, size = 0x4000, scoped, tag = 'input window, operand 2, single buffered']
    #allocation8 [shape = 'u8[16384]{0}', space=vmem, size = 0x4000, scoped, tag = 'input window, operand 3, single buffered']
    #allocation9 [shape = 's32[1]{0}', space=sflag, size = 0x4, scoped, tag = 'scoped memory for tpu_custom_call.1']
    #allocation10 [shape = 'u8[16384]{0}', space=vmem, size = 0x4000, scoped, tag = 'input window, operand 5, single buffered']
    #allocation11 [shape = 'u8[16384]{0}', space=vmem, size = 0x4000, scoped, tag = 'input window, operand 7, single buffered']
    #allocation12 [shape = 's32[1]{0}', space=sflag, size = 0x4, scoped, tag = 'scoped memory for tpu_custom_call.1']
    #allocation13 [shape = 'u8[8192]{0}', space=vmem, size = 0x2000, scoped, tag = 'output window, operand 0, single buffered']
    %14 = vsyncpa [#allocation3], 0
    %15 = vsyncpa [#allocation6], 0
    %16 = vsyncpa [#allocation9], 0
    %17 = vsyncpa [#allocation12], 0
    %18 = vsyncpa [#allocation4], 0
    // Predicated region
    $region2: #{tpu_custom_call.1} parent=1 // pred_check
      _
    $region3: #{tpu_custom_call.1} parent=1 // pred_check_branch
      %20 = sbr.rel (0) target = $region5
    $region4: #{tpu_custom_call.1} parent=1 // pred_region
      %s22 = ssub.s32 256, 256
      %23 = vsyncadd [#allocation3], %s22
      %s24 = sshll.u32 [#allocation2], 4
      %s25 = int_to_ptr.vmem [resolvable:$true] %s24
      %30 = dma.hbm_to_vmem [thread:$0]  %s0, 256, %s25, [#allocation3], 128, 128, 8
    $region5: #{tpu_custom_call.1} parent=1 // pred_fallthru
      _
    // Predicated region
    $region6: #{tpu_custom_call.1} parent=1 // pred_check
      _
    $region7: #{tpu_custom_call.1} parent=1 // pred_check_branch
      %32 = sbr.rel (0) target = $region9
    $region8: #{tpu_custom_call.1} parent=1 // pred_region
      %s34 = ssub.s32 512, 512
      %35 = vsyncadd [#allocation6], %s34
      %s36 = sshll.u32 [#allocation5], 4
      %s37 = int_to_ptr.vmem [resolvable:$true] %s36
      %42 = dma.hbm_to_vmem [thread:$0]  %s1, 512, %s37, [#allocation6], 128, 128, 8
    $region9: #{tpu_custom_call.1} parent=1 // pred_fallthru
      _
    // Predicated region
    $region10: #{tpu_custom_call.1} parent=1 // pred_check
      _
    $region11: #{tpu_custom_call.1} parent=1 // pred_check_branch
      %44 = sbr.rel (0) target = $region13
    $region12: #{tpu_custom_call.1} parent=1 // pred_region
      %s46 = ssub.s32 512, 512
      %47 = vsyncadd [#allocation6], %s46
      %s48 = sshll.u32 [#allocation7], 4
      %s49 = int_to_ptr.vmem [resolvable:$true] %s48
      %54 = dma.hbm_to_vmem [thread:$0]  %s2, 512, %s49, [#allocation6], 128, 128, 8
    $region13: #{tpu_custom_call.1} parent=1 // pred_fallthru
      _
    // Predicated region
    $region14: #{tpu_custom_call.1} parent=1 // pred_check
      _
    $region15: #{tpu_custom_call.1} parent=1 // pred_check_branch
      %56 = sbr.rel (0) target = $region17
    $region16: #{tpu_custom_call.1} parent=1 // pred_region
      %s58 = ssub.s32 512, 512
      %59 = vsyncadd [#allocation9], %s58
      %s60 = sshll.u32 [#allocation8], 4
      %s61 = int_to_ptr.vmem [resolvable:$true] %s60
      %66 = dma.hbm_to_vmem [thread:$0]  %s3, 512, %s61, [#allocation9], 128, 128, 8
    $region17: #{tpu_custom_call.1} parent=1 // pred_fallthru
      _
    // Predicated region
    $region18: #{tpu_custom_call.1} parent=1 // pred_check
      _
    $region19: #{tpu_custom_call.1} parent=1 // pred_check_branch
      %68 = sbr.rel (0) target = $region21
    $region20: #{tpu_custom_call.1} parent=1 // pred_region
      _
    $region21: #{tpu_custom_call.1} parent=1 // pred_fallthru
      _
    // Predicated region
    $region22: #{tpu_custom_call.1} parent=1 // pred_check
      _
    $region23: #{tpu_custom_call.1} parent=1 // pred_check_branch
      %70 = sbr.rel (0) target = $region25
    $region24: #{tpu_custom_call.1} parent=1 // pred_region
      %s72 = ssub.s32 512, 512
      %73 = vsyncadd [#allocation9], %s72
      %s74 = sshll.u32 [#allocation10], 4
      %s75 = int_to_ptr.vmem [resolvable:$true] %s74
      %80 = dma.hbm_to_vmem [thread:$0]  %s5, 512, %s75, [#allocation9], 128, 128, 8
    $region25: #{tpu_custom_call.1} parent=1 // pred_fallthru
      _
    // Predicated region
    $region26: #{tpu_custom_call.1} parent=1 // pred_check
      _
    $region27: #{tpu_custom_call.1} parent=1 // pred_check_branch
      %82 = sbr.rel (0) target = $region29
    $region28: #{tpu_custom_call.1} parent=1 // pred_region
      _
    $region29: #{tpu_custom_call.1} parent=1 // pred_fallthru
      _
    // Predicated region
    $region30: #{tpu_custom_call.1} parent=1 // pred_check
      _
    $region31: #{tpu_custom_call.1} parent=1 // pred_check_branch
      %84 = sbr.rel (0) target = $region33
    $region32: #{tpu_custom_call.1} parent=1 // pred_region
      %s86 = ssub.s32 512, 512
      %87 = vsyncadd [#allocation12], %s86
      %s88 = sshll.u32 [#allocation11], 4
      %s89 = int_to_ptr.vmem [resolvable:$true] %s88
      %94 = dma.hbm_to_vmem [thread:$0]  %s7, 512, %s89, [#allocation12], 128, 128, 8
    $region33: #{tpu_custom_call.1} parent=1 // pred_fallthru
      _
    // Predicated region
    $region34: #{tpu_custom_call.1} parent=1 // pred_check
      _
    $region35: #{tpu_custom_call.1} parent=1 // pred_check_branch
      %96 = sbr.rel (0) target = $region37
    $region36: #{tpu_custom_call.1} parent=1 // pred_region
      _
    $region37: #{tpu_custom_call.1} parent=1 // pred_fallthru
      _
    // Predicated region
    $region38: #{tpu_custom_call.1} parent=1 // pred_check
      _
    $region39: #{tpu_custom_call.1} parent=1 // pred_check_branch
      %98 = sbr.rel (0) target = $region41
    $region40: #{tpu_custom_call.1} parent=1 // pred_region
      %99 = dma.done [#allocation3], 256
    $region41: #{tpu_custom_call.1} parent=1 // pred_fallthru
      _
    // Predicated region
    $region42: #{tpu_custom_call.1} parent=1 // pred_check
      _
    $region43: #{tpu_custom_call.1} parent=1 // pred_check_branch
      %101 = sbr.rel (0) target = $region45
    $region44: #{tpu_custom_call.1} parent=1 // pred_region
      %102 = dma.done [#allocation6], 512
    $region45: #{tpu_custom_call.1} parent=1 // pred_fallthru
      _
    // Predicated region
    $region46: #{tpu_custom_call.1} parent=1 // pred_check
      _
    $region47: #{tpu_custom_call.1} parent=1 // pred_check_branch
      %104 = sbr.rel (0) target = $region49
    $region48: #{tpu_custom_call.1} parent=1 // pred_region
      %105 = dma.done [#allocation6], 512
    $region49: #{tpu_custom_call.1} parent=1 // pred_fallthru
      _
    // Predicated region
    $region50: #{tpu_custom_call.1} parent=1 // pred_check
      _
    $region51: #{tpu_custom_call.1} parent=1 // pred_check_branch
      %107 = sbr.rel (0) target = $region53
    $region52: #{tpu_custom_call.1} parent=1 // pred_region
      %108 = dma.done [#allocation9], 512
    $region53: #{tpu_custom_call.1} parent=1 // pred_fallthru
      _
    // Predicated region
    $region54: #{tpu_custom_call.1} parent=1 // pred_check
      _
    $region55: #{tpu_custom_call.1} parent=1 // pred_check_branch
      %110 = sbr.rel (0) target = $region57
    $region56: #{tpu_custom_call.1} parent=1 // pred_region
      %111 = dma.done [#allocation9], 512
    $region57: #{tpu_custom_call.1} parent=1 // pred_fallthru
      _
    // Predicated region
    $region58: #{tpu_custom_call.1} parent=1 // pred_check
      _
    $region59: #{tpu_custom_call.1} parent=1 // pred_check_branch
      %113 = sbr.rel (0) target = $region61
    $region60: #{tpu_custom_call.1} parent=1 // pred_region
      %114 = dma.done [#allocation12], 512
    $region61: #{tpu_custom_call.1} parent=1 // pred_fallthru
      _
    %v115 = vld [vmem:[#allocation2] sm:$0xff]
    %v116 = vld [vmem:[#allocation2 + $0x8] sm:$0xff]
    %v117 = vld [vmem:[#allocation5] sm:$0xff]
    %v118 = vld [vmem:[#allocation5 + $0x8] sm:$0xff]
    %v119 = vld [vmem:[#allocation5 + $0x10] sm:$0xff]
    %v120 = vld [vmem:[#allocation5 + $0x18] sm:$0xff]
    %v121 = vld [vmem:[#allocation7] sm:$0xff]
    %v122 = vld [vmem:[#allocation7 + $0x8] sm:$0xff]
    %v123 = vld [vmem:[#allocation7 + $0x10] sm:$0xff]
    %v124 = vld [vmem:[#allocation7 + $0x18] sm:$0xff]
    %v125 = vld [vmem:[#allocation8] sm:$0xff]
    %v126 = vld [vmem:[#allocation8 + $0x8] sm:$0xff]
    %v127 = vld [vmem:[#allocation8 + $0x10] sm:$0xff]
    %v128 = vld [vmem:[#allocation8 + $0x18] sm:$0xff]
    %v129 = vld [vmem:[%s4] sm:$0x1]
    %v131 = vlaneseq
    %v132 = vshrl.u32 %v131, 7
    %v133 = vsub.s32 0, %v132
    %v134 = vrot.slane %v129, %v133
    %vm136 = vcmask 261120
    %v138 = vsel %vm136, %v115, 0
    %v141 = vsel %vm136, %v116, 0
    %143 = vmatprep.subr.mxu0 0.0
    %144 = vmatpush1.msra.mxu0 %v125
    %145 = vmatprep.subr.mxu0 0.0
    %146 = vmatpush1.msra.mxu0 %v126
    %147 = vmatprep.subr.mxu0 0.0
    %148 = vmatpush1.msra.mxu0 %v127
    %149 = vmatprep.subr.mxu0 0.0
    %150 = vmatpush1.msra.mxu0 %v128
    %151 = vmatprep.subr.mxu0 0.0
    %152 = vmatpush1.msra.mxu0 0.0
    %153 = vmatprep.subr.mxu0 0.0
    %154 = vmatpush1.msra.mxu0 0.0
    %155 = vmatprep.subr.mxu0 0.0
    %156 = vmatpush1.msra.mxu0 0.0
    %157 = vmatprep.subr.mxu0 0.0
    %158 = vmatpush1.msra.mxu0 0.0
    %159 = vmatprep.subr.mxu0 0.0
    %160 = vmatpush1.msra.mxu0 0.0
    %161 = vmatprep.subr.mxu0 0.0
    %162 = vmatpush1.msra.mxu0 0.0
    %163 = vmatprep.subr.mxu0 0.0
    %164 = vmatpush1.msra.mxu0 0.0
    %165 = vmatprep.subr.mxu0 0.0
    %166 = vmatpush1.msra.mxu0 0.0
    %167 = vmatprep.subr.mxu0 0.0
    %168 = vmatpush1.msra.mxu0 0.0
    %169 = vmatprep.subr.mxu0 0.0
    %170 = vmatpush1.msra.mxu0 0.0
    %171 = vmatprep.subr.mxu0 0.0
    %172 = vmatpush1.msra.mxu0 0.0
    %173 = vmatprep.subr.mxu0 0.0
    %174 = vmatpush1.msra.mxu0 0.0
    %175 = vmatprep.subr.mxu0 0.0
    %176 = vmatpush1.msra.mxu0 0.0
    %177 = vmatprep.subr.mxu0 0.0
    %178 = vmatpush1.msra.mxu0 0.0
    %179 = vmatprep.subr.mxu0 0.0
    %180 = vmatpush1.msra.mxu0 0.0
    %181 = vmatprep.subr.mxu0 0.0
    %182 = vmatpush1.msra.mxu0 0.0
    %183 = vmatprep.subr.mxu0 0.0
    %184 = vmatpush1.msra.mxu0 0.0
    %185 = vmatprep.subr.mxu0 0.0
    %186 = vmatpush1.msra.mxu0 0.0
    %187 = vmatprep.subr.mxu0 0.0
    %188 = vmatpush1.msra.mxu0 0.0
    %189 = vmatprep.subr.mxu0 0.0
    %190 = vmatpush1.msra.mxu0 0.0
    %191 = vmatprep.subr.mxu0 0.0
    %192 = vmatpush1.msra.mxu0 0.0
    %193 = vmatprep.subr.mxu0 0.0
    %194 = vmatpush1.msra.mxu0 0.0
    %195 = vmatprep.subr.mxu0 0.0
    %196 = vmatpush1.msra.mxu0 0.0
    %197 = vmatprep.subr.mxu0 0.0
    %198 = vmatpush1.msra.mxu0 0.0
    %199 = vmatprep.subr.mxu0 0.0
    %200 = vmatpush1.msra.mxu0 0.0
    %201 = vmatprep.subr.mxu0 0.0
    %202 = vmatpush1.msra.mxu0 0.0
    %203 = vmatprep.subr.mxu0 0.0
    %204 = vmatpush1.msra.mxu0 0.0
    %205 = vmatprep.subr.mxu0 0.0
    %206 = vmatpush1.msra.mxu0 0.0
    %207 = vmatprep.mubr.f32.mxu0 0.0
    %208 = vmatmul.mubr.f32.gmra.mrb[0].mxu0 %v138
    %v209 = vpop.f32.mrb[0].mxu0
    %v210 = vadd.f32 %v134, %v209
    %v211 = vpop.f32.mrb[0].mxu0
    %212 = vmatprep.mubr.f32.mxu0 0.0
    %213 = vmatmul.mubr.f32.gmra.mrb[0].mxu0 %v141
    %v214 = vpop.f32.mrb[0].mxu0
    %v215 = vadd.f32 %v134, %v214
    %v216 = vpop.f32.mrb[0].mxu0
    %217 = vdwg.mxu0
    %v218 = vld [vmem:[#allocation10] sm:$0xff]
    %v219 = vld [vmem:[#allocation10 + $0x8] sm:$0xff]
    %v220 = vld [vmem:[#allocation10 + $0x10] sm:$0xff]
    %v221 = vld [vmem:[#allocation10 + $0x18] sm:$0xff]
    %v222 = vld [vmem:[%s6] sm:$0x1]
    %v224 = vlaneseq
    %v225 = vshrl.u32 %v224, 7
    %v226 = vsub.s32 0, %v225
    %v227 = vrot.slane %v222, %v226
    %v230 = vsel %vm136, %v117, 0
    %v233 = vsel %vm136, %v118, 0
    %v236 = vsel %vm136, %v119, 0
    %v239 = vsel %vm136, %v120, 0
    %241 = vmatprep.subr.mxu0 0.0
    %242 = vmatpush1.msra.mxu0 %v218
    %243 = vmatprep.subr.mxu0 0.0
    %244 = vmatpush1.msra.mxu0 %v219
    %245 = vmatprep.subr.mxu0 0.0
    %246 = vmatpush1.msra.mxu0 %v220
    %247 = vmatprep.subr.mxu0 0.0
    %248 = vmatpush1.msra.mxu0 %v221
    %249 = vmatprep.subr.mxu0 0.0
    %250 = vmatpush1.msra.mxu0 0.0
    %251 = vmatprep.subr.mxu0 0.0
    %252 = vmatpush1.msra.mxu0 0.0
    %253 = vmatprep.subr.mxu0 0.0
    %254 = vmatpush1.msra.mxu0 0.0
    %255 = vmatprep.subr.mxu0 0.0
    %256 = vmatpush1.msra.mxu0 0.0
    %257 = vmatprep.subr.mxu0 0.0
    %258 = vmatpush1.msra.mxu0 0.0
    %259 = vmatprep.subr.mxu0 0.0
    %260 = vmatpush1.msra.mxu0 0.0
    %261 = vmatprep.subr.mxu0 0.0
    %262 = vmatpush1.msra.mxu0 0.0
    %263 = vmatprep.subr.mxu0 0.0
    %264 = vmatpush1.msra.mxu0 0.0
    %265 = vmatprep.subr.mxu0 0.0
    %266 = vmatpush1.msra.mxu0 0.0
    %267 = vmatprep.subr.mxu0 0.0
    %268 = vmatpush1.msra.mxu0 0.0
    %269 = vmatprep.subr.mxu0 0.0
    %270 = vmatpush1.msra.mxu0 0.0
    %271 = vmatprep.subr.mxu0 0.0
    %272 = vmatpush1.msra.mxu0 0.0
    %273 = vmatprep.subr.mxu0 0.0
    %274 = vmatpush1.msra.mxu0 0.0
    %275 = vmatprep.subr.mxu0 0.0
    %276 = vmatpush1.msra.mxu0 0.0
    %277 = vmatprep.subr.mxu0 0.0
    %278 = vmatpush1.msra.mxu0 0.0
    %279 = vmatprep.subr.mxu0 0.0
    %280 = vmatpush1.msra.mxu0 0.0
    %281 = vmatprep.subr.mxu0 0.0
    %282 = vmatpush1.msra.mxu0 0.0
    %283 = vmatprep.subr.mxu0 0.0
    %284 = vmatpush1.msra.mxu0 0.0
    %285 = vmatprep.subr.mxu0 0.0
    %286 = vmatpush1.msra.mxu0 0.0
    %287 = vmatprep.subr.mxu0 0.0
    %288 = vmatpush1.msra.mxu0 0.0
    %289 = vmatprep.subr.mxu0 0.0
    %290 = vmatpush1.msra.mxu0 0.0
    %291 = vmatprep.subr.mxu0 0.0
    %292 = vmatpush1.msra.mxu0 0.0
    %293 = vmatprep.subr.mxu0 0.0
    %294 = vmatpush1.msra.mxu0 0.0
    %295 = vmatprep.subr.mxu0 0.0
    %296 = vmatpush1.msra.mxu0 0.0
    %297 = vmatprep.subr.mxu0 0.0
    %298 = vmatpush1.msra.mxu0 0.0
    %299 = vmatprep.subr.mxu0 0.0
    %300 = vmatpush1.msra.mxu0 0.0
    %301 = vmatprep.subr.mxu0 0.0
    %302 = vmatpush1.msra.mxu0 0.0
    %303 = vmatprep.subr.mxu0 0.0
    %304 = vmatpush1.msra.mxu0 0.0
    %305 = vmatprep.mubr.f32.mxu0 0.0
    %306 = vmatmul.mubr.f32.gmra.mrb[0].mxu0 %v230
    %v307 = vpop.f32.mrb[0].mxu0
    %v308 = vadd.f32 %v227, %v307
    %v309 = vpop.f32.mrb[0].mxu0
    %310 = vmatprep.mubr.f32.mxu0 0.0
    %311 = vmatmul.mubr.f32.gmra.mrb[0].mxu0 %v233
    %v312 = vpop.f32.mrb[0].mxu0
    %v313 = vadd.f32 %v227, %v312
    %v314 = vpop.f32.mrb[0].mxu0
    %315 = vmatprep.mubr.f32.mxu0 0.0
    %316 = vmatmul.mubr.f32.gmra.mrb[0].mxu0 %v236
    %v317 = vpop.f32.mrb[0].mxu0
    %v318 = vadd.f32 %v227, %v317
    %v319 = vpop.f32.mrb[0].mxu0
    %320 = vmatprep.mubr.f32.mxu0 0.0
    %321 = vmatmul.mubr.f32.gmra.mrb[0].mxu0 %v239
    %v322 = vpop.f32.mrb[0].mxu0
    %v323 = vadd.f32 %v227, %v322
    %v324 = vpop.f32.mrb[0].mxu0
    %325 = vdwg.mxu0
    %v326 = vld [vmem:[#allocation11] sm:$0xff]
    %v327 = vld [vmem:[#allocation11 + $0x8] sm:$0xff]
    %v328 = vld [vmem:[#allocation11 + $0x10] sm:$0xff]
    %v329 = vld [vmem:[#allocation11 + $0x18] sm:$0xff]
    %v330 = vld [vmem:[%s8] sm:$0x1]
    %v332 = vlaneseq
    %v333 = vshrl.u32 %v332, 7
    %v334 = vsub.s32 0, %v333
    %v335 = vrot.slane %v330, %v334
    %v338 = vsel %vm136, %v121, 0
    %v341 = vsel %vm136, %v122, 0
    %v344 = vsel %vm136, %v123, 0
    %v347 = vsel %vm136, %v124, 0
    %349 = vmatprep.subr.mxu0 0.0
    %350 = vmatpush1.msra.mxu0 %v326
    %351 = vmatprep.subr.mxu0 0.0
    %352 = vmatpush1.msra.mxu0 %v327
    %353 = vmatprep.subr.mxu0 0.0
    %354 = vmatpush1.msra.mxu0 %v328
    %355 = vmatprep.subr.mxu0 0.0
    %356 = vmatpush1.msra.mxu0 %v329
    %357 = vmatprep.subr.mxu0 0.0
    %358 = vmatpush1.msra.mxu0 0.0
    %359 = vmatprep.subr.mxu0 0.0
    %360 = vmatpush1.msra.mxu0 0.0
    %361 = vmatprep.subr.mxu0 0.0
    %362 = vmatpush1.msra.mxu0 0.0
    %363 = vmatprep.subr.mxu0 0.0
    %364 = vmatpush1.msra.mxu0 0.0
    %365 = vmatprep.subr.mxu0 0.0
    %366 = vmatpush1.msra.mxu0 0.0
    %367 = vmatprep.subr.mxu0 0.0
    %368 = vmatpush1.msra.mxu0 0.0
    %369 = vmatprep.subr.mxu0 0.0
    %370 = vmatpush1.msra.mxu0 0.0
    %371 = vmatprep.subr.mxu0 0.0
    %372 = vmatpush1.msra.mxu0 0.0
    %373 = vmatprep.subr.mxu0 0.0
    %374 = vmatpush1.msra.mxu0 0.0
    %375 = vmatprep.subr.mxu0 0.0
    %376 = vmatpush1.msra.mxu0 0.0
    %377 = vmatprep.subr.mxu0 0.0
    %378 = vmatpush1.msra.mxu0 0.0
    %379 = vmatprep.subr.mxu0 0.0
    %380 = vmatpush1.msra.mxu0 0.0
    %381 = vmatprep.subr.mxu0 0.0
    %382 = vmatpush1.msra.mxu0 0.0
    %383 = vmatprep.subr.mxu0 0.0
    %384 = vmatpush1.msra.mxu0 0.0
    %385 = vmatprep.subr.mxu0 0.0
    %386 = vmatpush1.msra.mxu0 0.0
    %387 = vmatprep.subr.mxu0 0.0
    %388 = vmatpush1.msra.mxu0 0.0
    %389 = vmatprep.subr.mxu0 0.0
    %390 = vmatpush1.msra.mxu0 0.0
    %391 = vmatprep.subr.mxu0 0.0
    %392 = vmatpush1.msra.mxu0 0.0
    %393 = vmatprep.subr.mxu0 0.0
    %394 = vmatpush1.msra.mxu0 0.0
    %395 = vmatprep.subr.mxu0 0.0
    %396 = vmatpush1.msra.mxu0 0.0
    %397 = vmatprep.subr.mxu0 0.0
    %398 = vmatpush1.msra.mxu0 0.0
    %399 = vmatprep.subr.mxu0 0.0
    %400 = vmatpush1.msra.mxu0 0.0
    %401 = vmatprep.subr.mxu0 0.0
    %402 = vmatpush1.msra.mxu0 0.0
    %403 = vmatprep.subr.mxu0 0.0
    %404 = vmatpush1.msra.mxu0 0.0
    %405 = vmatprep.subr.mxu0 0.0
    %406 = vmatpush1.msra.mxu0 0.0
    %407 = vmatprep.subr.mxu0 0.0
    %408 = vmatpush1.msra.mxu0 0.0
    %409 = vmatprep.subr.mxu0 0.0
    %410 = vmatpush1.msra.mxu0 0.0
    %411 = vmatprep.subr.mxu0 0.0
    %412 = vmatpush1.msra.mxu0 0.0
    %413 = vmatprep.mubr.f32.mxu0 0.0
    %414 = vmatmul.mubr.f32.gmra.mrb[0].mxu0 %v338
    %v415 = vpop.f32.mrb[0].mxu0
    %v416 = vadd.f32 %v335, %v415
    %v417 = vpop.f32.mrb[0].mxu0
    %418 = vmatprep.mubr.f32.mxu0 0.0
    %419 = vmatmul.mubr.f32.gmra.mrb[0].mxu0 %v341
    %v420 = vpop.f32.mrb[0].mxu0
    %v421 = vadd.f32 %v335, %v420
    %v422 = vpop.f32.mrb[0].mxu0
    %423 = vmatprep.mubr.f32.mxu0 0.0
    %424 = vmatmul.mubr.f32.gmra.mrb[0].mxu0 %v344
    %v425 = vpop.f32.mrb[0].mxu0
    %v426 = vadd.f32 %v335, %v425
    %v427 = vpop.f32.mrb[0].mxu0
    %428 = vmatprep.mubr.f32.mxu0 0.0
    %429 = vmatmul.mubr.f32.gmra.mrb[0].mxu0 %v347
    %v430 = vpop.f32.mrb[0].mxu0
    %v431 = vadd.f32 %v335, %v430
    %v432 = vpop.f32.mrb[0].mxu0
    %433 = vdwg.mxu0
    %v435 = vsel %vm136, %v210, 0
    %v438 = vsel %vm136, %v308, 0
    %v441 = vsel %vm136, %v313, 0
    %443 = vmatprep.subr.mxu0 0.0
    %444 = vmatpush1.xpose.msra.mxu0 %v438
    %445 = vmatprep.subr.mxu0 0.0
    %446 = vmatpush1.xpose.msra.mxu0 %v441
    %447 = vmatprep.subr.mxu0 0.0
    %448 = vmatpush1.xpose.msra.mxu0 0.0
    %449 = vmatprep.subr.mxu0 0.0
    %450 = vmatpush1.xpose.msra.mxu0 0.0
    %451 = vmatprep.subr.mxu0 0.0
    %452 = vmatpush1.xpose.msra.mxu0 0.0
    %453 = vmatprep.subr.mxu0 0.0
    %454 = vmatpush1.xpose.msra.mxu0 0.0
    %455 = vmatprep.subr.mxu0 0.0
    %456 = vmatpush1.xpose.msra.mxu0 0.0
    %457 = vmatprep.subr.mxu0 0.0
    %458 = vmatpush1.xpose.msra.mxu0 0.0
    %459 = vmatprep.subr.mxu0 0.0
    %460 = vmatpush1.xpose.msra.mxu0 0.0
    %461 = vmatprep.subr.mxu0 0.0
    %462 = vmatpush1.xpose.msra.mxu0 0.0
    %463 = vmatprep.subr.mxu0 0.0
    %464 = vmatpush1.xpose.msra.mxu0 0.0
    %465 = vmatprep.subr.mxu0 0.0
    %466 = vmatpush1.xpose.msra.mxu0 0.0
    %467 = vmatprep.subr.mxu0 0.0
    %468 = vmatpush1.xpose.msra.mxu0 0.0
    %469 = vmatprep.subr.mxu0 0.0
    %470 = vmatpush1.xpose.msra.mxu0 0.0
    %471 = vmatprep.subr.mxu0 0.0
    %472 = vmatpush1.xpose.msra.mxu0 0.0
    %473 = vmatprep.subr.mxu0 0.0
    %474 = vmatpush1.xpose.msra.mxu0 0.0
    %475 = vmatprep.subr.mxu0 0.0
    %476 = vmatpush1.xpose.msra.mxu0 0.0
    %477 = vmatprep.subr.mxu0 0.0
    %478 = vmatpush1.xpose.msra.mxu0 0.0
    %479 = vmatprep.subr.mxu0 0.0
    %480 = vmatpush1.xpose.msra.mxu0 0.0
    %481 = vmatprep.subr.mxu0 0.0
    %482 = vmatpush1.xpose.msra.mxu0 0.0
    %483 = vmatprep.subr.mxu0 0.0
    %484 = vmatpush1.xpose.msra.mxu0 0.0
    %485 = vmatprep.subr.mxu0 0.0
    %486 = vmatpush1.xpose.msra.mxu0 0.0
    %487 = vmatprep.subr.mxu0 0.0
    %488 = vmatpush1.xpose.msra.mxu0 0.0
    %489 = vmatprep.subr.mxu0 0.0
    %490 = vmatpush1.xpose.msra.mxu0 0.0
    %491 = vmatprep.subr.mxu0 0.0
    %492 = vmatpush1.xpose.msra.mxu0 0.0
    %493 = vmatprep.subr.mxu0 0.0
    %494 = vmatpush1.xpose.msra.mxu0 0.0
    %495 = vmatprep.subr.mxu0 0.0
    %496 = vmatpush1.xpose.msra.mxu0 0.0
    %497 = vmatprep.subr.mxu0 0.0
    %498 = vmatpush1.xpose.msra.mxu0 0.0
    %499 = vmatprep.subr.mxu0 0.0
    %500 = vmatpush1.xpose.msra.mxu0 0.0
    %501 = vmatprep.subr.mxu0 0.0
    %502 = vmatpush1.xpose.msra.mxu0 0.0
    %503 = vmatprep.subr.mxu0 0.0
    %504 = vmatpush1.xpose.msra.mxu0 0.0
    %505 = vmatprep.subr.mxu0 0.0
    %506 = vmatpush1.xpose.msra.mxu0 0.0
    %507 = vmatprep.mubr.f32.mxu0 0.0
    %508 = vmatmul.mubr.f32.gmra.mrb[0].mxu0 %v435
    %v509 = vpop.f32.mrb[0].mxu0
    %v510 = vadd.f32 0.0, %v509
    %v511 = vpop.f32.mrb[0].mxu0
    %512 = vdwg.mxu0
    %v514 = vsel %vm136, %v215, 0
    %v517 = vsel %vm136, %v318, 0
    %v520 = vsel %vm136, %v323, 0
    %522 = vmatprep.subr.mxu0 0.0
    %523 = vmatpush1.xpose.msra.mxu0 %v517
    %524 = vmatprep.subr.mxu0 0.0
    %525 = vmatpush1.xpose.msra.mxu0 %v520
    %526 = vmatprep.subr.mxu0 0.0
    %527 = vmatpush1.xpose.msra.mxu0 0.0
    %528 = vmatprep.subr.mxu0 0.0
    %529 = vmatpush1.xpose.msra.mxu0 0.0
    %530 = vmatprep.subr.mxu0 0.0
    %531 = vmatpush1.xpose.msra.mxu0 0.0
    %532 = vmatprep.subr.mxu0 0.0
    %533 = vmatpush1.xpose.msra.mxu0 0.0
    %534 = vmatprep.subr.mxu0 0.0
    %535 = vmatpush1.xpose.msra.mxu0 0.0
    %536 = vmatprep.subr.mxu0 0.0
    %537 = vmatpush1.xpose.msra.mxu0 0.0
    %538 = vmatprep.subr.mxu0 0.0
    %539 = vmatpush1.xpose.msra.mxu0 0.0
    %540 = vmatprep.subr.mxu0 0.0
    %541 = vmatpush1.xpose.msra.mxu0 0.0
    %542 = vmatprep.subr.mxu0 0.0
    %543 = vmatpush1.xpose.msra.mxu0 0.0
    %544 = vmatprep.subr.mxu0 0.0
    %545 = vmatpush1.xpose.msra.mxu0 0.0
    %546 = vmatprep.subr.mxu0 0.0
    %547 = vmatpush1.xpose.msra.mxu0 0.0
    %548 = vmatprep.subr.mxu0 0.0
    %549 = vmatpush1.xpose.msra.mxu0 0.0
    %550 = vmatprep.subr.mxu0 0.0
    %551 = vmatpush1.xpose.msra.mxu0 0.0
    %552 = vmatprep.subr.mxu0 0.0
    %553 = vmatpush1.xpose.msra.mxu0 0.0
    %554 = vmatprep.subr.mxu0 0.0
    %555 = vmatpush1.xpose.msra.mxu0 0.0
    %556 = vmatprep.subr.mxu0 0.0
    %557 = vmatpush1.xpose.msra.mxu0 0.0
    %558 = vmatprep.subr.mxu0 0.0
    %559 = vmatpush1.xpose.msra.mxu0 0.0
    %560 = vmatprep.subr.mxu0 0.0
    %561 = vmatpush1.xpose.msra.mxu0 0.0
    %562 = vmatprep.subr.mxu0 0.0
    %563 = vmatpush1.xpose.msra.mxu0 0.0
    %564 = vmatprep.subr.mxu0 0.0
    %565 = vmatpush1.xpose.msra.mxu0 0.0
    %566 = vmatprep.subr.mxu0 0.0
    %567 = vmatpush1.xpose.msra.mxu0 0.0
    %568 = vmatprep.subr.mxu0 0.0
    %569 = vmatpush1.xpose.msra.mxu0 0.0
    %570 = vmatprep.subr.mxu0 0.0
    %571 = vmatpush1.xpose.msra.mxu0 0.0
    %572 = vmatprep.subr.mxu0 0.0
    %573 = vmatpush1.xpose.msra.mxu0 0.0
    %574 = vmatprep.subr.mxu0 0.0
    %575 = vmatpush1.xpose.msra.mxu0 0.0
    %576 = vmatprep.subr.mxu0 0.0
    %577 = vmatpush1.xpose.msra.mxu0 0.0
    %578 = vmatprep.subr.mxu0 0.0
    %579 = vmatpush1.xpose.msra.mxu0 0.0
    %580 = vmatprep.subr.mxu0 0.0
    %581 = vmatpush1.xpose.msra.mxu0 0.0
    %582 = vmatprep.subr.mxu0 0.0
    %583 = vmatpush1.xpose.msra.mxu0 0.0
    %584 = vmatprep.subr.mxu0 0.0
    %585 = vmatpush1.xpose.msra.mxu0 0.0
    %586 = vmatprep.mubr.f32.mxu0 0.0
    %587 = vmatmul.mubr.f32.gmra.mrb[0].mxu0 %v514
    %v588 = vpop.f32.mrb[0].mxu0
    %v589 = vadd.f32 0.0, %v588
    %v590 = vpop.f32.mrb[0].mxu0
    %591 = vdwg.mxu0
    %v592 = vmul.f32 %v510, 0.17677669
    %v593 = vmul.f32 %v589, 0.17677669
    %vm594 = vcmask 130048
    %v595 = vsel %vm594, %v592, -inf
    %596 = vmax.xlane.f32.xlu0 %v595
    %v597 = vpop.xlane.xlu0 %596
    %v598 = vsel %vm594, %v593, -inf
    %599 = vmax.xlane.f32.xlu0 %v598
    %v600 = vpop.xlane.xlu0 %599
    %v601 = vsub.f32 %v592, %v597
    %v602 = vsub.f32 %v593, %v600
    %v603 = vmul.f32 %v601, 1.442695
    %v604 = vpow.pop %v603
    %v605 = vmul.f32 %v602, 1.442695
    %v606 = vpow.pop %v605
    %v607 = vsel %vm594, %v604, 0.0
    %608 = vadd.xlane.f32.xlu0 %v607
    %v609 = vpop.xlane.xlu0 %608
    %v610 = vsel %vm594, %v606, 0.0
    %611 = vadd.xlane.f32.xlu0 %v610
    %v612 = vpop.xlane.xlu0 %611
    %v613 = vrcp.pop %v609
    %v614 = vrcp.pop %v612
    %v615 = vmul.f32 %v604, %v613
    %v616 = vmul.f32 %v606, %v614
    %v618 = vsel %vm594, %v615, 0
    %620 = vmatprep.subr.mxu0 0.0
    %621 = vmatpush1.msra.mxu0 %v416
    %622 = vmatprep.subr.mxu0 0.0
    %623 = vmatpush1.msra.mxu0 %v421
    %624 = vmatprep.subr.mxu0 0.0
    %625 = vmatpush1.msra.mxu0 0.0
    %626 = vmatprep.subr.mxu0 0.0
    %627 = vmatpush1.msra.mxu0 0.0
    %628 = vmatprep.subr.mxu0 0.0
    %629 = vmatpush1.msra.mxu0 0.0
    %630 = vmatprep.subr.mxu0 0.0
    %631 = vmatpush1.msra.mxu0 0.0
    %632 = vmatprep.subr.mxu0 0.0
    %633 = vmatpush1.msra.mxu0 0.0
    %634 = vmatprep.subr.mxu0 0.0
    %635 = vmatpush1.msra.mxu0 0.0
    %636 = vmatprep.subr.mxu0 0.0
    %637 = vmatpush1.msra.mxu0 0.0
    %638 = vmatprep.subr.mxu0 0.0
    %639 = vmatpush1.msra.mxu0 0.0
    %640 = vmatprep.subr.mxu0 0.0
    %641 = vmatpush1.msra.mxu0 0.0
    %642 = vmatprep.subr.mxu0 0.0
    %643 = vmatpush1.msra.mxu0 0.0
    %644 = vmatprep.subr.mxu0 0.0
    %645 = vmatpush1.msra.mxu0 0.0
    %646 = vmatprep.subr.mxu0 0.0
    %647 = vmatpush1.msra.mxu0 0.0
    %648 = vmatprep.subr.mxu0 0.0
    %649 = vmatpush1.msra.mxu0 0.0
    %650 = vmatprep.subr.mxu0 0.0
    %651 = vmatpush1.msra.mxu0 0.0
    %652 = vmatprep.subr.mxu0 0.0
    %653 = vmatpush1.msra.mxu0 0.0
    %654 = vmatprep.subr.mxu0 0.0
    %655 = vmatpush1.msra.mxu0 0.0
    %656 = vmatprep.subr.mxu0 0.0
    %657 = vmatpush1.msra.mxu0 0.0
    %658 = vmatprep.subr.mxu0 0.0
    %659 = vmatpush1.msra.mxu0 0.0
    %660 = vmatprep.subr.mxu0 0.0
    %661 = vmatpush1.msra.mxu0 0.0
    %662 = vmatprep.subr.mxu0 0.0
    %663 = vmatpush1.msra.mxu0 0.0
    %664 = vmatprep.subr.mxu0 0.0
    %665 = vmatpush1.msra.mxu0 0.0
    %666 = vmatprep.subr.mxu0 0.0
    %667 = vmatpush1.msra.mxu0 0.0
    %668 = vmatprep.subr.mxu0 0.0
    %669 = vmatpush1.msra.mxu0 0.0
    %670 = vmatprep.subr.mxu0 0.0
    %671 = vmatpush1.msra.mxu0 0.0
    %672 = vmatprep.subr.mxu0 0.0
    %673 = vmatpush1.msra.mxu0 0.0
    %674 = vmatprep.subr.mxu0 0.0
    %675 = vmatpush1.msra.mxu0 0.0
    %676 = vmatprep.subr.mxu0 0.0
    %677 = vmatpush1.msra.mxu0 0.0
    %678 = vmatprep.subr.mxu0 0.0
    %679 = vmatpush1.msra.mxu0 0.0
    %680 = vmatprep.subr.mxu0 0.0
    %681 = vmatpush1.msra.mxu0 0.0
    %682 = vmatprep.subr.mxu0 0.0
    %683 = vmatpush1.msra.mxu0 0.0
    %684 = vmatprep.mubr.f32.mxu0 0.0
    %685 = vmatmul.mubr.f32.gmra.mrb[0].mxu0 %v618
    %v686 = vpop.f32.mrb[0].mxu0
    %v687 = vadd.f32 0.0, %v686
    %v688 = vpop.f32.mrb[0].mxu0
    %689 = vdwg.mxu0
    %v691 = vsel %vm594, %v616, 0
    %693 = vmatprep.subr.mxu0 0.0
    %694 = vmatpush1.msra.mxu0 %v426
    %695 = vmatprep.subr.mxu0 0.0
    %696 = vmatpush1.msra.mxu0 %v431
    %697 = vmatprep.subr.mxu0 0.0
    %698 = vmatpush1.msra.mxu0 0.0
    %699 = vmatprep.subr.mxu0 0.0
    %700 = vmatpush1.msra.mxu0 0.0
    %701 = vmatprep.subr.mxu0 0.0
    %702 = vmatpush1.msra.mxu0 0.0
    %703 = vmatprep.subr.mxu0 0.0
    %704 = vmatpush1.msra.mxu0 0.0
    %705 = vmatprep.subr.mxu0 0.0
    %706 = vmatpush1.msra.mxu0 0.0
    %707 = vmatprep.subr.mxu0 0.0
    %708 = vmatpush1.msra.mxu0 0.0
    %709 = vmatprep.subr.mxu0 0.0
    %710 = vmatpush1.msra.mxu0 0.0
    %711 = vmatprep.subr.mxu0 0.0
    %712 = vmatpush1.msra.mxu0 0.0
    %713 = vmatprep.subr.mxu0 0.0
    %714 = vmatpush1.msra.mxu0 0.0
    %715 = vmatprep.subr.mxu0 0.0
    %716 = vmatpush1.msra.mxu0 0.0
    %717 = vmatprep.subr.mxu0 0.0
    %718 = vmatpush1.msra.mxu0 0.0
    %719 = vmatprep.subr.mxu0 0.0
    %720 = vmatpush1.msra.mxu0 0.0
    %721 = vmatprep.subr.mxu0 0.0
    %722 = vmatpush1.msra.mxu0 0.0
    %723 = vmatprep.subr.mxu0 0.0
    %724 = vmatpush1.msra.mxu0 0.0
    %725 = vmatprep.subr.mxu0 0.0
    %726 = vmatpush1.msra.mxu0 0.0
    %727 = vmatprep.subr.mxu0 0.0
    %728 = vmatpush1.msra.mxu0 0.0
    %729 = vmatprep.subr.mxu0 0.0
    %730 = vmatpush1.msra.mxu0 0.0
    %731 = vmatprep.subr.mxu0 0.0
    %732 = vmatpush1.msra.mxu0 0.0
    %733 = vmatprep.subr.mxu0 0.0
    %734 = vmatpush1.msra.mxu0 0.0
    %735 = vmatprep.subr.mxu0 0.0
    %736 = vmatpush1.msra.mxu0 0.0
    %737 = vmatprep.subr.mxu0 0.0
    %738 = vmatpush1.msra.mxu0 0.0
    %739 = vmatprep.subr.mxu0 0.0
    %740 = vmatpush1.msra.mxu0 0.0
    %741 = vmatprep.subr.mxu0 0.0
    %742 = vmatpush1.msra.mxu0 0.0
    %743 = vmatprep.subr.mxu0 0.0
    %744 = vmatpush1.msra.mxu0 0.0
    %745 = vmatprep.subr.mxu0 0.0
    %746 = vmatpush1.msra.mxu0 0.0
    %747 = vmatprep.subr.mxu0 0.0
    %748 = vmatpush1.msra.mxu0 0.0
    %749 = vmatprep.subr.mxu0 0.0
    %750 = vmatpush1.msra.mxu0 0.0
    %751 = vmatprep.subr.mxu0 0.0
    %752 = vmatpush1.msra.mxu0 0.0
    %753 = vmatprep.subr.mxu0 0.0
    %754 = vmatpush1.msra.mxu0 0.0
    %755 = vmatprep.subr.mxu0 0.0
    %756 = vmatpush1.msra.mxu0 0.0
    %757 = vmatprep.mubr.f32.mxu0 0.0
    %758 = vmatmul.mubr.f32.gmra.mrb[0].mxu0 %v691
    %v759 = vpop.f32.mrb[0].mxu0
    %v760 = vadd.f32 0.0, %v759
    %v761 = vpop.f32.mrb[0].mxu0
    %762 = vdwg.mxu0
    %763 = vst.msk [vmem:[#allocation13] sm:$0xff] %vm136, %v687
    %764 = vst.msk [vmem:[#allocation13 + $0x8] sm:$0xff] %vm136, %v760
    // Predicated region
    $region62: #{tpu_custom_call.1} parent=1 // pred_check
      _
    $region63: #{tpu_custom_call.1} parent=1 // pred_check_branch
      %766 = sbr.rel (0) target = $region65
    $region64: #{tpu_custom_call.1} parent=1 // pred_region
      %s768 = ssub.s32 256, 256
      %769 = vsyncadd [#allocation4], %s768
      %s770 = sshll.u32 [#allocation13], 4
      %s771 = int_to_ptr.vmem [resolvable:$true] %s770
      %776 = dma.vmem_to_hbm [thread:$0]  %s771, 256, %s9, [#allocation4], 128, 128, 8
    $region65: #{tpu_custom_call.1} parent=1 // pred_fallthru
      _
    // Predicated region
    $region66: #{tpu_custom_call.1} parent=1 // pred_check
      _
    $region67: #{tpu_custom_call.1} parent=1 // pred_check_branch
      %778 = sbr.rel (0) target = $region69
    $region68: #{tpu_custom_call.1} parent=1 // pred_region
      %779 = dma.done [#allocation4], 256
    $region69: #{tpu_custom_call.1} parent=1 // pred_fallthru
      _
    %780 = vsyncpa [#allocation3], 1
    %781 = vsyncpa [#allocation6], 1
    %782 = vsyncpa [#allocation9], 1
    %783 = vsyncpa [#allocation12], 1
    %784 = vsyncpa [#allocation4], 1

</llo_original>
